<compile_context>
chip_gen: v7x
topology: tpu7x:2x2x1
jax: 0.10.0
libtpu: 0.0.40
codegen_flags: <defaults>
</compile_context>

<pallas_src>
import jax
import jax.numpy as jnp
from jax.experimental import pallas as pl
from jax.experimental.pallas import tpu as pltpu


_ROW_TILE_MAX = 2048    # rows per grid step for the natural (B, 6) layout
_LANE_TILE_MAX = 4096   # batch lanes per grid step for the (6, B) layout


def _round_up(n, m):
    return -(-n // m) * m


def _row_tile(b):
    """Row tile for the (B, 6) layout: big tiles, but >=2 grid steps for
    mid-size batches so v7x's two TensorCores both get work."""
    if b <= 256:
        return b                                   # one tile; launch overhead dominates
    return min(_ROW_TILE_MAX, _round_up(-(-b // 2), 8))


def _lane_tile(b):
    """Lane tile for the (6, B) layout (multiple of 128 when tiled)."""
    if b <= 1024:
        return b
    return min(_LANE_TILE_MAX, _round_up(-(-b // 2), 128))


def _resblock_rows_kernel(x_ref, wt_ref, bo_ref, o_ref):
    # x: (tb, in), wt: (in, out) = W^T, bo: (1, out) = bias + other.
    acc = jnp.dot(x_ref[...], wt_ref[...], preferred_element_type=jnp.float32)
    o_ref[...] = (acc + bo_ref[...]).astype(o_ref.dtype)


def _resblock_lanes_kernel(xt_ref, w_ref, bo_ref, o_ref):
    # Lane-dense transposed problem: Y^T = W @ X^T + (bias + other)[:, None].
    # xt: (in, tl), w: (out, in), bo: (out, 1). Output block (out, tl) is
    # lane-dense -> unmasked full-lane HBM stores.
    acc = jnp.dot(w_ref[...], xt_ref[...], preferred_element_type=jnp.float32)
    o_ref[...] = (acc + bo_ref[...]).astype(o_ref.dtype)


def make_resblock(weight, bias, other):
    """Build ResBlock forward: y = x @ W.T + bias + other.

    weight: (out, in) in PyTorch nn.Linear convention; bias: (out,); other: (out,).
    Returns (forward, forward_lanes):
      forward(x):        x of shape (in,) or (B, in)  -> (out,) or (B, out)
      forward_lanes(xt): xt of shape (in, B)          -> (out, B)   [lane-dense]
    """
    weight = jnp.asarray(weight, jnp.float32)
    bias = jnp.asarray(bias, jnp.float32)
    other = jnp.asarray(other, jnp.float32)
    out_f, in_f = weight.shape

    # Setup-time folding (once, not per call).
    wt = weight.T                          # (in, out):  y = x @ wt
    bo_row = (bias + other)[None, :]       # (1, out)   epilogue add, row layout
    bo_col = (bias + other)[:, None]       # (out, 1)   epilogue add, lane-dense layout

    def _batch_rows(x):
        b = x.shape[0]
        tb = _row_tile(b)
        # Ragged last block (b % tb != 0) is handled by Pallas: OOB output rows
        # are masked on store and cannot contaminate valid rows, so no wrapper
        # padding traffic is needed.
        return pl.pallas_call(
            _resblock_rows_kernel,
            out_shape=jax.ShapeDtypeStruct((b, out_f), x.dtype),
            grid_spec=pltpu.PrefetchScalarGridSpec(
                num_scalar_prefetch=0,
                grid=(pl.cdiv(b, tb),),
                in_specs=[
                    pl.BlockSpec((tb, in_f), lambda i: (i, 0)),
                    pl.BlockSpec((in_f, out_f), lambda i: (0, 0)),   # resident
                    pl.BlockSpec((1, out_f), lambda i: (0, 0)),      # resident
                ],
                out_specs=pl.BlockSpec((tb, out_f), lambda i: (i, 0)),
            ),
            compiler_params=pltpu.CompilerParams(
                dimension_semantics=("parallel",)),
        )(x, wt.astype(x.dtype), bo_row)

    def forward(x):
        if x.ndim == 1:
            # Standalone 72-FLOP row: custom-call launch + DMAs dominate, so
            # compute in plain jnp and let XLA fuse (perf review item 6).
            return (x.astype(jnp.float32) @ wt + bo_row[0]).astype(x.dtype)
        return _batch_rows(x)

    def forward_lanes(xt):
        # xt: (in, B) with the batch on the lane axis; returns (out, B).
        b = xt.shape[1]
        tl = _lane_tile(b)
        return pl.pallas_call(
            _resblock_lanes_kernel,
            out_shape=jax.ShapeDtypeStruct((out_f, b), xt.dtype),
            grid_spec=pltpu.PrefetchScalarGridSpec(
                num_scalar_prefetch=0,
                grid=(pl.cdiv(b, tl),),
                in_specs=[
                    pl.BlockSpec((in_f, tl), lambda i: (0, i)),
                    pl.BlockSpec((out_f, in_f), lambda i: (0, 0)),   # resident
                    pl.BlockSpec((out_f, 1), lambda i: (0, 0)),      # resident
                ],
                out_specs=pl.BlockSpec((out_f, tl), lambda i: (0, i)),
            ),
            compiler_params=pltpu.CompilerParams(
                dimension_semantics=("parallel",)),
        )(xt, weight.astype(xt.dtype), bo_col)

    return forward, forward_lanes


if __name__ == "__main__":
    key = jax.random.PRNGKey(0)
    k_x, k_w, k_b, k_o, k_b8, k_b300, k_lanes = jax.random.split(key, 7)

    feat = 6
    # PyTorch Linear init is U(-1/sqrt(in), 1/sqrt(in)); mimic the range.
    bound = 1.0 / jnp.sqrt(jnp.float32(feat))
    weight = jax.random.uniform(k_w, (feat, feat), minval=-bound, maxval=bound,
                                dtype=jnp.float32)
    bias = jax.random.uniform(k_b, (feat,), minval=-bound, maxval=bound,
                              dtype=jnp.float32)
    other = jax.random.normal(k_o, (feat,), dtype=jnp.float32)

    forward, forward_lanes = make_resblock(weight, bias, other)

    def ref_fn(x):
        return x @ weight.T + bias + other

    # 1) Module-spec input: x1 of shape (6,)  (plain-jnp path per perf review).
    x1 = jax.random.normal(k_x, (feat,), dtype=jnp.float32)
    y1 = jax.block_until_ready(forward(x1))
    assert y1.shape == (feat,)
    assert jnp.allclose(y1, ref_fn(x1), atol=1e-5, rtol=1e-5)

    # 2) Small batch -> Pallas row-layout kernel (single tile).
    xb = jax.random.normal(k_b8, (8, feat), dtype=jnp.float32)
    yb = jax.block_until_ready(forward(xb))
    assert yb.shape == (8, feat)
    assert jnp.allclose(yb, ref_fn(xb), atol=1e-5, rtol=1e-5)

    # 3) Mid batch -> 2-step grid with a ragged last block (exercises masked
    #    tail stores and the >=2-tile split that feeds v7x's two TensorCores).
    xm = jax.random.normal(k_b300, (300, feat), dtype=jnp.float32)
    ym = jax.block_until_ready(forward(xm))
    assert ym.shape == (300, feat)
    assert jnp.allclose(ym, ref_fn(xm), atol=1e-5, rtol=1e-5)

    # 4) Lane-dense layout: batch on the lane axis, (6, B) in / (6, B) out.
    xt = jax.random.normal(k_lanes, (feat, 8), dtype=jnp.float32)
    yt = jax.block_until_ready(forward_lanes(xt))
    assert yt.shape == (feat, 8)
    assert jnp.allclose(yt, ref_fn(xt.T).T, atol=1e-5, rtol=1e-5)

    print("KERNEL_OK")
</pallas_src>

<mosaic_0001>
module attributes {stable_mosaic.version = 11 : i64} {
  func.func @_resblock_rows_kernel(%arg0: i32, %arg1: memref<8x6xf32, #tpu.memory_space<vmem>>, %arg2: memref<6x6xf32, #tpu.memory_space<vmem>>, %arg3: memref<1x6xf32, #tpu.memory_space<vmem>>, %arg4: memref<8x6xf32, #tpu.memory_space<vmem>>) attributes {dimension_semantics = [#tpu.dimension_semantics<parallel>], iteration_bounds = array<i64: 1>, scalar_prefetch = 0 : i64, scratch_operands = 0 : i64, tpu.core_type = #tpu.core_type<tc>, window_params = [{transform_indices = @transform_0, window_bounds = array<i64: 8, 6>}, {pipeline_mode = #tpu.pipeline_mode<synchronous>, transform_indices = @transform_1, window_bounds = array<i64: 6, 6>}, {pipeline_mode = #tpu.pipeline_mode<synchronous>, transform_indices = @transform_2, window_bounds = array<i64: 1, 6>}, {transform_indices = @transform_3, window_bounds = array<i64: 8, 6>}]} {
    %c0 = arith.constant 0 : index
    %c0_0 = arith.constant 0 : index
    %0 = vector.load %arg1[%c0, %c0_0] : memref<8x6xf32, #tpu.memory_space<vmem>>, vector<8x6xf32>
    %c0_1 = arith.constant 0 : index
    %c0_2 = arith.constant 0 : index
    %1 = vector.load %arg2[%c0_1, %c0_2] : memref<6x6xf32, #tpu.memory_space<vmem>>, vector<6x6xf32>
    %cst = arith.constant dense<0.000000e+00> : vector<8x6xf32>
    %2 = tpu.matmul %0, %1, %cst {dimension_numbers = #tpu.dot_dimension_numbers<[1], [0], [0], [1], [0, 0, 1, 1], [], []>} : vector<8x6xf32>, vector<6x6xf32>, vector<8x6xf32> -> vector<8x6xf32>
    %c0_3 = arith.constant 0 : index
    %c0_4 = arith.constant 0 : index
    %3 = vector.load %arg3[%c0_3, %c0_4] : memref<1x6xf32, #tpu.memory_space<vmem>>, vector<1x6xf32>
    %4 = vector.broadcast %3 : vector<1x6xf32> to vector<8x6xf32>
    %5 = arith.addf %2, %4 : vector<8x6xf32>
    %c0_5 = arith.constant 0 : index
    %c0_6 = arith.constant 0 : index
    %6 = vector.load %arg4[%c0_5, %c0_6] : memref<8x6xf32, #tpu.memory_space<vmem>>, vector<8x6xf32>
    tpu.vector_store %arg4[%c0_5, %c0_6], %5 {strides = array<i32>} : memref<8x6xf32, #tpu.memory_space<vmem>>, vector<8x6xf32>,
    return
  }
  func.func @transform_0(%arg0: i32) -> (i32, i32) {
    %c0_i32 = arith.constant 0 : i32
    %c0_i32_0 = arith.constant 0 : i32
    return %arg0, %c0_i32 : i32, i32
  }
  func.func @transform_1(%arg0: i32) -> (i32, i32) {
    %c0_i32 = arith.constant 0 : i32
    %c0_i32_0 = arith.constant 0 : i32
    %c0_i32_1 = arith.constant 0 : i32
    return %c0_i32, %c0_i32_0 : i32, i32
  }
  func.func @transform_2(%arg0: i32) -> (i32, i32) {
    %c0_i32 = arith.constant 0 : i32
    %c0_i32_0 = arith.constant 0 : i32
    %c0_i32_1 = arith.constant 0 : i32
    return %c0_i32, %c0_i32_0 : i32, i32
  }
  func.func @transform_3(%arg0: i32) -> (i32, i32) {
    %c0_i32 = arith.constant 0 : i32
    %c0_i32_0 = arith.constant 0 : i32
    return %arg0, %c0_i32 : i32, i32
  }
}

</mosaic_0001>

<llo_original>
// kernel: tpu_custom_call.1
$region0: #{tpu_custom_call.1}
  #allocation0 [shape = 'u32[]', space=smem, size = 0x4, offset = 0x4, fixed_abs, tag = 'smem constant byte address 0x4 - core index']
  #allocation1 [shape = 'u32[144,128]{1,0:T(1,128)}', space=vmem, size = 0x12000, scoped, tag = 'internal scratch']
  %s0 = inlined_call_operand.hbm [shape: f32[8,6], index: 0, kind: input, shape index: {}]
  %s1 = inlined_call_operand.hbm [shape: f32[6,6], index: 1, kind: input, shape index: {}]
  %s2 = inlined_call_operand.vmem [shape: f32[1,6], index: 2, kind: input, shape index: {}]
  %s3 = inlined_call_operand.hbm [shape: f32[8,6], index: 3, kind: output, shape index: {}]
  %s4 = sld [smem:[#allocation0]]
  $region30: #{tpu_custom_call.1} parent=0
    _
  %s6 = ssub.s32 1, %s4
  %s7 = scalar_select 0, %s6, %s4
  $region1: #{tpu_custom_call.1} parent=0
    #allocation2 [shape = 'u8[4096]{0}', space=vmem, size = 0x1000, scoped, tag = 'input window, operand 0, single buffered']
    #allocation3 [shape = 's32[1]{0}', space=sflag, size = 0x4, scoped, tag = 'scoped memory for tpu_custom_call.1']
    #allocation4 [shape = 's32[1]{0}', space=sflag, size = 0x4, scoped, tag = 'scoped memory for tpu_custom_call.1']
    #allocation5 [shape = 'u8[4096]{0}', space=vmem, size = 0x1000, scoped, tag = 'input window, operand 1, single buffered']
    #allocation6 [shape = 's32[1]{0}', space=sflag, size = 0x4, scoped, tag = 'scoped memory for tpu_custom_call.1']
    #allocation7 [shape = 'u8[4096]{0}', space=vmem, size = 0x1000, scoped, tag = 'output window, operand 0, single buffered']
    %8 = vsyncpa [#allocation3], 0
    %9 = vsyncpa [#allocation6], 0
    %10 = vsyncpa [#allocation4], 0
    // Predicated region
    $region2: #{tpu_custom_call.1} parent=1 // pred_check
      _
    $region3: #{tpu_custom_call.1} parent=1 // pred_check_branch
      %12 = sbr.rel (0) target = $region5
    $region4: #{tpu_custom_call.1} parent=1 // pred_region
      %s14 = ssub.s32 128, 128
      %15 = vsyncadd [#allocation3], %s14
      %s17 = sshll.u32 [#allocation2], 4
      %s18 = int_to_ptr.vmem [resolvable:$true] %s17
      %20 = dma.hbm_to_vmem [thread:$0]  %s0, 128, %s18, [#allocation3]
    $region5: #{tpu_custom_call.1} parent=1 // pred_fallthru
      _
    // Predicated region
    $region6: #{tpu_custom_call.1} parent=1 // pred_check
      _
    $region7: #{tpu_custom_call.1} parent=1 // pred_check_branch
      %22 = sbr.rel (0) target = $region9
    $region8: #{tpu_custom_call.1} parent=1 // pred_region
      %s24 = ssub.s32 128, 128
      %25 = vsyncadd [#allocation6], %s24
      %s27 = sshll.u32 [#allocation5], 4
      %s28 = int_to_ptr.vmem [resolvable:$true] %s27
      %30 = dma.hbm_to_vmem [thread:$0]  %s1, 128, %s28, [#allocation6]
    $region9: #{tpu_custom_call.1} parent=1 // pred_fallthru
      _
    // Predicated region
    $region10: #{tpu_custom_call.1} parent=1 // pred_check
      _
    $region11: #{tpu_custom_call.1} parent=1 // pred_check_branch
      %32 = sbr.rel (0) target = $region13
    $region12: #{tpu_custom_call.1} parent=1 // pred_region
      _
    $region13: #{tpu_custom_call.1} parent=1 // pred_fallthru
      _
    // Predicated region
    $region14: #{tpu_custom_call.1} parent=1 // pred_check
      _
    $region15: #{tpu_custom_call.1} parent=1 // pred_check_branch
      %34 = sbr.rel (0) target = $region17
    $region16: #{tpu_custom_call.1} parent=1 // pred_region
      %35 = dma.done [#allocation3], 128
    $region17: #{tpu_custom_call.1} parent=1 // pred_fallthru
      _
    // Predicated region
    $region18: #{tpu_custom_call.1} parent=1 // pred_check
      _
    $region19: #{tpu_custom_call.1} parent=1 // pred_check_branch
      %37 = sbr.rel (0) target = $region21
    $region20: #{tpu_custom_call.1} parent=1 // pred_region
      %38 = dma.done [#allocation6], 128
    $region21: #{tpu_custom_call.1} parent=1 // pred_fallthru
      _
    %v39 = vld [vmem:[#allocation2] sm:$0xff]
    %v40 = vld [vmem:[#allocation5] sm:$0x3f]
    %v41 = vld [vmem:[%s2] sm:$0x1]
    %v43 = vlaneseq
    %v44 = vshrl.u32 %v43, 7
    %v45 = vsub.s32 0, %v44
    %v46 = vrot.slane %v41, %v45
    %vm48 = vcmask 48128
    %v50 = vsel %vm48, %v39, 0
    %vm52 = vcmask 1045504
    %v54 = vsel %vm52, %v40, 0
    %56 = vmatprep.subr.mxu0 0.0
    %57 = vmatpush1.msra.mxu0 %v54
    %58 = vmatprep.subr.mxu0 0.0
    %59 = vmatpush1.msra.mxu0 0.0
    %60 = vmatprep.subr.mxu0 0.0
    %61 = vmatpush1.msra.mxu0 0.0
    %62 = vmatprep.subr.mxu0 0.0
    %63 = vmatpush1.msra.mxu0 0.0
    %64 = vmatprep.subr.mxu0 0.0
    %65 = vmatpush1.msra.mxu0 0.0
    %66 = vmatprep.subr.mxu0 0.0
    %67 = vmatpush1.msra.mxu0 0.0
    %68 = vmatprep.subr.mxu0 0.0
    %69 = vmatpush1.msra.mxu0 0.0
    %70 = vmatprep.subr.mxu0 0.0
    %71 = vmatpush1.msra.mxu0 0.0
    %72 = vmatprep.subr.mxu0 0.0
    %73 = vmatpush1.msra.mxu0 0.0
    %74 = vmatprep.subr.mxu0 0.0
    %75 = vmatpush1.msra.mxu0 0.0
    %76 = vmatprep.subr.mxu0 0.0
    %77 = vmatpush1.msra.mxu0 0.0
    %78 = vmatprep.subr.mxu0 0.0
    %79 = vmatpush1.msra.mxu0 0.0
    %80 = vmatprep.subr.mxu0 0.0
    %81 = vmatpush1.msra.mxu0 0.0
    %82 = vmatprep.subr.mxu0 0.0
    %83 = vmatpush1.msra.mxu0 0.0
    %84 = vmatprep.subr.mxu0 0.0
    %85 = vmatpush1.msra.mxu0 0.0
    %86 = vmatprep.subr.mxu0 0.0
    %87 = vmatpush1.msra.mxu0 0.0
    %88 = vmatprep.subr.mxu0 0.0
    %89 = vmatpush1.msra.mxu0 0.0
    %90 = vmatprep.subr.mxu0 0.0
    %91 = vmatpush1.msra.mxu0 0.0
    %92 = vmatprep.subr.mxu0 0.0
    %93 = vmatpush1.msra.mxu0 0.0
    %94 = vmatprep.subr.mxu0 0.0
    %95 = vmatpush1.msra.mxu0 0.0
    %96 = vmatprep.subr.mxu0 0.0
    %97 = vmatpush1.msra.mxu0 0.0
    %98 = vmatprep.subr.mxu0 0.0
    %99 = vmatpush1.msra.mxu0 0.0
    %100 = vmatprep.subr.mxu0 0.0
    %101 = vmatpush1.msra.mxu0 0.0
    %102 = vmatprep.subr.mxu0 0.0
    %103 = vmatpush1.msra.mxu0 0.0
    %104 = vmatprep.subr.mxu0 0.0
    %105 = vmatpush1.msra.mxu0 0.0
    %106 = vmatprep.subr.mxu0 0.0
    %107 = vmatpush1.msra.mxu0 0.0
    %108 = vmatprep.subr.mxu0 0.0
    %109 = vmatpush1.msra.mxu0 0.0
    %110 = vmatprep.subr.mxu0 0.0
    %111 = vmatpush1.msra.mxu0 0.0
    %112 = vmatprep.subr.mxu0 0.0
    %113 = vmatpush1.msra.mxu0 0.0
    %114 = vmatprep.subr.mxu0 0.0
    %115 = vmatpush1.msra.mxu0 0.0
    %116 = vmatprep.subr.mxu0 0.0
    %117 = vmatpush1.msra.mxu0 0.0
    %118 = vmatprep.subr.mxu0 0.0
    %119 = vmatpush1.msra.mxu0 0.0
    %120 = vmatprep.mubr.f32.mxu0 0.0
    %121 = vmatmul.mubr.f32.gmra.mrb[0].mxu0 %v50
    %v122 = vpop.f32.mrb[0].mxu0
    %v123 = vadd.f32 %v46, %v122
    %v124 = vpop.f32.mrb[0].mxu0
    %125 = vdwg.mxu0
    %126 = vst.msk [vmem:[#allocation7] sm:$0xff] %vm48, %v123
    // Predicated region
    $region22: #{tpu_custom_call.1} parent=1 // pred_check
      _
    $region23: #{tpu_custom_call.1} parent=1 // pred_check_branch
      %128 = sbr.rel (0) target = $region25
    $region24: #{tpu_custom_call.1} parent=1 // pred_region
      %s130 = ssub.s32 128, 128
      %131 = vsyncadd [#allocation4], %s130
      %s133 = sshll.u32 [#allocation7], 4
      %s134 = int_to_ptr.vmem [resolvable:$true] %s133
      %136 = dma.vmem_to_hbm [thread:$0]  %s134, 128, %s3, [#allocation4]
    $region25: #{tpu_custom_call.1} parent=1 // pred_fallthru
      _
    // Predicated region
    $region26: #{tpu_custom_call.1} parent=1 // pred_check
      _
    $region27: #{tpu_custom_call.1} parent=1 // pred_check_branch
      %138 = sbr.rel (0) target = $region29
    $region28: #{tpu_custom_call.1} parent=1 // pred_region
      %139 = dma.done [#allocation4], 128
    $region29: #{tpu_custom_call.1} parent=1 // pred_fallthru
      _
    %140 = vsyncpa [#allocation3], 1
    %141 = vsyncpa [#allocation6], 1
    %142 = vsyncpa [#allocation4], 1

</llo_original>
